<compile_context>
chip_gen: v6e
topology: v6e:2x2x1
jax: 0.10.0
libtpu: 0.0.40
codegen_flags: <defaults>
</compile_context>

<pallas_src>
import jax
import jax.numpy as jnp
from jax import lax
from jax.experimental import pallas as pl
from jax.experimental.pallas import tpu as pltpu


_LANE = 128

_ACTIVATIONS = {
    "Tanh": jnp.tanh,
    "ReLU": lambda v: jnp.maximum(v, 0.0),
    "Sigmoid": jax.nn.sigmoid,
    "ELU": jax.nn.elu,
}


# ---------------------------------------------------------------------------
# Tiling helpers
# ---------------------------------------------------------------------------
def _round_up(x: int, m: int) -> int:
    return ((x + m - 1) // m) * m


def _largest_divisor_leq(n: int, bound: int) -> int:
    """Largest divisor of `n` that is <= bound (always >= 1)."""
    return max(g for g in range(1, min(n, bound) + 1) if n % g == 0)


def _choose_tiling(b_pad: int, tile_b_target: int, lane_chunk_target: int):
    """Pick (tile_b, lane_chunk, num_chunks, grid_steps).

    Guarantees:
      * tile_b divides b_pad exactly (no padding waste beyond 128-rounding).
      * >= 2 grid steps whenever b_pad >= 256 (keeps both v7x TCs busy).
      * lane_chunk divides tile_b exactly (uniform unrolled inner loop).
    """
    n128 = b_pad // _LANE
    tgt = max(1, tile_b_target // _LANE)
    if n128 >= 2:
        tgt = min(tgt, n128 // 2)          # at least 2 grid steps when possible
    tgt = max(1, min(tgt, n128))
    tile_groups = _largest_divisor_leq(n128, tgt)
    tile_b = tile_groups * _LANE

    cgt = max(1, min(lane_chunk_target // _LANE, tile_groups))
    chunk_groups = _largest_divisor_leq(tile_groups, cgt)
    lane_chunk = chunk_groups * _LANE
    num_chunks = tile_groups // chunk_groups
    grid_steps = n128 // tile_groups
    return tile_b, lane_chunk, num_chunks, grid_steps


# ---------------------------------------------------------------------------
# Kernel
# ---------------------------------------------------------------------------
def _make_mlp_kernel(num_layers: int, activation_name: str,
                     lane_chunk: int, num_chunks: int):
    """Fused feature-major MLP kernel.

    Ref order: (x_ref, w0, b0, ..., w_{L-1}, b_{L-1}, o_ref).
      x_ref : [lad, tile_b]   (batch on lanes)
      w_l   : [out_l, in_l]   (PyTorch nn.Linear layout)
      b_l   : [out_l, 1]
      o_ref : [lsd, tile_b]
    Activation after every layer except the last (matches the Sequential).
    """
    act_fn = _ACTIVATIONS[activation_name]

    def kernel(*refs):
        x_ref = refs[0]
        o_ref = refs[-1]

        # Tiny parameters: load once per grid step, reused for every chunk.
        ws = [refs[1 + 2 * l][...] for l in range(num_layers)]
        bs = [refs[2 + 2 * l][...] for l in range(num_layers)]

        def apply_mlp(x):
            h = x.astype(jnp.float32)
            for l in range(num_layers):
                h = jnp.dot(ws[l], h, preferred_element_type=jnp.float32) + bs[l]
                if l < num_layers - 1:
                    h = act_fn(h)
            return h

        if num_chunks == 1:
            o_ref[...] = apply_mlp(x_ref[...]).astype(o_ref.dtype)
        else:
            # Lane-chunked chain keeps live f32 data small (<= ~40 vregs at
            # 512 lanes) while the grid step itself stays big.
            def chunk_body(c, carry):
                off = pl.multiple_of(c * lane_chunk, _LANE)
                o_ref[:, pl.ds(off, lane_chunk)] = apply_mlp(
                    x_ref[:, pl.ds(off, lane_chunk)]).astype(o_ref.dtype)
                return carry

            lax.fori_loop(0, num_chunks, chunk_body, None, unroll=True)

    return kernel


# ---------------------------------------------------------------------------
# Wrapper
# ---------------------------------------------------------------------------
def control_forward(action, weights, biases, activation: str, *,
                    tile_b: int = 4096, lane_chunk: int = 512):
    """Fused MLP forward pass (the `Control` module) as one pallas_call.

    action  : [B, lad] float32
    weights : list of [out, in] float32 arrays (PyTorch nn.Linear layout)
    biases  : list of [out, 1]  float32 arrays
    returns : [B, lsd] float32

    tile_b / lane_chunk are tunables (per-step lanes and in-kernel chunk).
    On v7x, larger tile_b (e.g. 8192) is beneficial for very large batches.
    """
    if activation not in _ACTIVATIONS:
        raise ValueError(
            f"Unsupported activation {activation!r}; expected one of "
            f"{sorted(_ACTIVATIONS)}")

    B, lad = action.shape
    num_layers = len(weights)
    lsd = weights[-1].shape[0]

    # Pad the batch only to the next lane multiple; tile_b divides b_pad.
    b_pad = _round_up(max(B, 1), _LANE)
    tb, lc, num_chunks, grid_steps = _choose_tiling(b_pad, tile_b, lane_chunk)

    # Padded feature-major input in a single fused op (one pass over input).
    if b_pad == B:
        x_t = action.T
    else:
        x_t = jnp.pad(action, ((0, b_pad - B), (0, 0))).T        # [lad, b_pad]

    kernel = _make_mlp_kernel(num_layers, activation, lc, num_chunks)

    in_specs = [pl.BlockSpec((lad, tb), lambda i: (0, i))]
    flat_params = []
    for w, b in zip(weights, biases):
        in_specs.append(pl.BlockSpec(w.shape, lambda i: (0, 0)))
        in_specs.append(pl.BlockSpec(b.shape, lambda i: (0, 0)))
        flat_params.extend([w, b])

    out_spec = pl.BlockSpec((lsd, tb), lambda i: (0, i))

    # Advisory cost estimate so XLA can schedule/overlap the surrounding
    # pad/transpose/slice instead of serializing around this tiny kernel.
    flops = 2 * b_pad * sum(int(w.shape[0]) * int(w.shape[1]) for w in weights)
    transcendentals = 0 if activation == "ReLU" else b_pad * sum(
        int(w.shape[0]) for w in weights[:-1])
    param_bytes = 4 * sum(int(w.size) + int(b.size)
                          for w, b in zip(weights, biases))
    bytes_accessed = 4 * b_pad * (lad + lsd) + param_bytes

    out_t = pl.pallas_call(
        kernel,
        out_shape=jax.ShapeDtypeStruct((lsd, b_pad), action.dtype),
        grid_spec=pltpu.PrefetchScalarGridSpec(
            num_scalar_prefetch=0,
            grid=(grid_steps,),
            in_specs=in_specs,
            out_specs=out_spec,
        ),
        compiler_params=pltpu.CompilerParams(
            dimension_semantics=("parallel",),
        ),
        cost_estimate=pl.CostEstimate(
            flops=flops,
            transcendentals=transcendentals,
            bytes_accessed=bytes_accessed,
        ),
    )(x_t, *flat_params)

    # Back to batch-major, dropping the batch padding.
    return out_t[:, :B].T


# ---------------------------------------------------------------------------
# Deterministic parameter init (synthetic; mirrors nn.Linear shapes)
# ---------------------------------------------------------------------------
def init_control_params(key, lad, lsd, num_hidden, dtype=jnp.float32):
    dims = [lad] + list(num_hidden) + [lsd]
    weights, biases = [], []
    for i in range(len(dims) - 1):
        fan_in, fan_out = dims[i], dims[i + 1]
        key, kw, kb = jax.random.split(key, 3)
        bound = 1.0 / jnp.sqrt(jnp.asarray(fan_in, dtype=jnp.float32))
        # PyTorch nn.Linear layout: weight [out, in]; bias stored as [out, 1].
        w = jax.random.uniform(kw, (fan_out, fan_in), dtype, -bound, bound)
        b = jax.random.uniform(kb, (fan_out, 1), dtype, -bound, bound)
        weights.append(w)
        biases.append(b)
    return weights, biases


def control_reference(action, weights, biases, activation: str):
    act = _ACTIVATIONS[activation]
    h = action
    n = len(weights)
    for i, (w, b) in enumerate(zip(weights, biases)):
        h = h @ w.T + b.reshape(1, -1)
        if i < n - 1:
            h = act(h)
    return h


# ---------------------------------------------------------------------------
# Main
# ---------------------------------------------------------------------------
if __name__ == "__main__":
    # Control(lad=8, lsd=16, num_hidden=(32, 32), activation="Tanh")
    LAD, LSD = 8, 16
    NUM_HIDDEN = (32, 32)
    ACTIVATION = "Tanh"

    key = jax.random.PRNGKey(0)
    key, k_params = jax.random.split(key)
    weights, biases = init_control_params(k_params, LAD, LSD, NUM_HIDDEN)

    # Exercise: (a) tiny ragged batch (1 grid step), (b) ragged multi-step
    # batch, (c) batch large enough to hit the multi-chunk inner loop and a
    # multi-step "parallel" grid.
    for batch in (16, 300, 2048):
        key, k_act = jax.random.split(key)
        action = jax.random.normal(k_act, (batch, LAD), dtype=jnp.float32)

        out = control_forward(action, weights, biases, ACTIVATION)
        out = jax.block_until_ready(out)

        ref = control_reference(action, weights, biases, ACTIVATION)
        assert out.shape == (batch, LSD), (batch, out.shape)
        assert jnp.allclose(out, ref, atol=1e-5, rtol=1e-5), \
            f"mismatch vs reference at batch={batch}"

    print("KERNEL_OK")
</pallas_src>

<mosaic_0001>
module attributes {stable_mosaic.version = 11 : i64} {
  func.func @kernel(%arg0: i32, %arg1: memref<8x128xf32, #tpu.memory_space<vmem>>, %arg2: memref<32x8xf32, #tpu.memory_space<vmem>>, %arg3: memref<32x1xf32, #tpu.memory_space<vmem>>, %arg4: memref<32x32xf32, #tpu.memory_space<vmem>>, %arg5: memref<32x1xf32, #tpu.memory_space<vmem>>, %arg6: memref<16x32xf32, #tpu.memory_space<vmem>>, %arg7: memref<16x1xf32, #tpu.memory_space<vmem>>, %arg8: memref<16x128xf32, #tpu.memory_space<vmem>>) attributes {dimension_semantics = [#tpu.dimension_semantics<parallel>], iteration_bounds = array<i64: 1>, scalar_prefetch = 0 : i64, scratch_operands = 0 : i64, tpu.core_type = #tpu.core_type<tc>, window_params = [{transform_indices = @transform_0, window_bounds = array<i64: 8, 128>}, {pipeline_mode = #tpu.pipeline_mode<synchronous>, transform_indices = @transform_1, window_bounds = array<i64: 32, 8>}, {pipeline_mode = #tpu.pipeline_mode<synchronous>, transform_indices = @transform_2, window_bounds = array<i64: 32, 1>}, {pipeline_mode = #tpu.pipeline_mode<synchronous>, transform_indices = @transform_3, window_bounds = array<i64: 32, 32>}, {pipeline_mode = #tpu.pipeline_mode<synchronous>, transform_indices = @transform_4, window_bounds = array<i64: 32, 1>}, {pipeline_mode = #tpu.pipeline_mode<synchronous>, transform_indices = @transform_5, window_bounds = array<i64: 16, 32>}, {pipeline_mode = #tpu.pipeline_mode<synchronous>, transform_indices = @transform_6, window_bounds = array<i64: 16, 1>}, {transform_indices = @transform_7, window_bounds = array<i64: 16, 128>}]} {
    %c0 = arith.constant 0 : index
    %c0_0 = arith.constant 0 : index
    %0 = vector.load %arg2[%c0, %c0_0] : memref<32x8xf32, #tpu.memory_space<vmem>>, vector<32x8xf32>
    %c0_1 = arith.constant 0 : index
    %c0_2 = arith.constant 0 : index
    %1 = vector.load %arg4[%c0_1, %c0_2] : memref<32x32xf32, #tpu.memory_space<vmem>>, vector<32x32xf32>
    %c0_3 = arith.constant 0 : index
    %c0_4 = arith.constant 0 : index
    %2 = vector.load %arg6[%c0_3, %c0_4] : memref<16x32xf32, #tpu.memory_space<vmem>>, vector<16x32xf32>
    %c0_5 = arith.constant 0 : index
    %c0_6 = arith.constant 0 : index
    %3 = vector.load %arg3[%c0_5, %c0_6] : memref<32x1xf32, #tpu.memory_space<vmem>>, vector<32x1xf32>
    %c0_7 = arith.constant 0 : index
    %c0_8 = arith.constant 0 : index
    %4 = vector.load %arg5[%c0_7, %c0_8] : memref<32x1xf32, #tpu.memory_space<vmem>>, vector<32x1xf32>
    %c0_9 = arith.constant 0 : index
    %c0_10 = arith.constant 0 : index
    %5 = vector.load %arg7[%c0_9, %c0_10] : memref<16x1xf32, #tpu.memory_space<vmem>>, vector<16x1xf32>
    %c0_11 = arith.constant 0 : index
    %c0_12 = arith.constant 0 : index
    %6 = vector.load %arg1[%c0_11, %c0_12] : memref<8x128xf32, #tpu.memory_space<vmem>>, vector<8x128xf32>
    %cst = arith.constant dense<0.000000e+00> : vector<32x128xf32>
    %7 = tpu.matmul %0, %6, %cst {dimension_numbers = #tpu.dot_dimension_numbers<[1], [0], [0], [1], [0, 0, 1, 1], [], []>} : vector<32x8xf32>, vector<8x128xf32>, vector<32x128xf32> -> vector<32x128xf32>
    %8 = vector.broadcast %3 : vector<32x1xf32> to vector<32x128xf32>
    %9 = arith.addf %7, %8 : vector<32x128xf32>
    %10 = math.tanh %9 : vector<32x128xf32>
    %cst_13 = arith.constant dense<0.000000e+00> : vector<32x128xf32>
    %11 = tpu.matmul %1, %10, %cst_13 {dimension_numbers = #tpu.dot_dimension_numbers<[1], [0], [0], [1], [0, 0, 1, 1], [], []>} : vector<32x32xf32>, vector<32x128xf32>, vector<32x128xf32> -> vector<32x128xf32>
    %12 = vector.broadcast %4 : vector<32x1xf32> to vector<32x128xf32>
    %13 = arith.addf %11, %12 : vector<32x128xf32>
    %14 = math.tanh %13 : vector<32x128xf32>
    %cst_14 = arith.constant dense<0.000000e+00> : vector<16x128xf32>
    %15 = tpu.matmul %2, %14, %cst_14 {dimension_numbers = #tpu.dot_dimension_numbers<[1], [0], [0], [1], [0, 0, 1, 1], [], []>} : vector<16x32xf32>, vector<32x128xf32>, vector<16x128xf32> -> vector<16x128xf32>
    %16 = vector.broadcast %5 : vector<16x1xf32> to vector<16x128xf32>
    %17 = arith.addf %15, %16 : vector<16x128xf32>
    %c0_15 = arith.constant 0 : index
    %c0_16 = arith.constant 0 : index
    %18 = vector.load %arg8[%c0_15, %c0_16] : memref<16x128xf32, #tpu.memory_space<vmem>>, vector<16x128xf32>
    tpu.vector_store %arg8[%c0_15, %c0_16], %17 {strides = array<i32>} : memref<16x128xf32, #tpu.memory_space<vmem>>, vector<16x128xf32>,
    return
  }
  func.func @transform_0(%arg0: i32) -> (i32, i32) {
    %c0_i32 = arith.constant 0 : i32
    %c0_i32_0 = arith.constant 0 : i32
    return %c0_i32, %arg0 : i32, i32
  }
  func.func @transform_1(%arg0: i32) -> (i32, i32) {
    %c0_i32 = arith.constant 0 : i32
    %c0_i32_0 = arith.constant 0 : i32
    %c0_i32_1 = arith.constant 0 : i32
    return %c0_i32, %c0_i32_0 : i32, i32
  }
  func.func @transform_2(%arg0: i32) -> (i32, i32) {
    %c0_i32 = arith.constant 0 : i32
    %c0_i32_0 = arith.constant 0 : i32
    %c0_i32_1 = arith.constant 0 : i32
    return %c0_i32, %c0_i32_0 : i32, i32
  }
  func.func @transform_3(%arg0: i32) -> (i32, i32) {
    %c0_i32 = arith.constant 0 : i32
    %c0_i32_0 = arith.constant 0 : i32
    %c0_i32_1 = arith.constant 0 : i32
    return %c0_i32, %c0_i32_0 : i32, i32
  }
  func.func @transform_4(%arg0: i32) -> (i32, i32) {
    %c0_i32 = arith.constant 0 : i32
    %c0_i32_0 = arith.constant 0 : i32
    %c0_i32_1 = arith.constant 0 : i32
    return %c0_i32, %c0_i32_0 : i32, i32
  }
  func.func @transform_5(%arg0: i32) -> (i32, i32) {
    %c0_i32 = arith.constant 0 : i32
    %c0_i32_0 = arith.constant 0 : i32
    %c0_i32_1 = arith.constant 0 : i32
    return %c0_i32, %c0_i32_0 : i32, i32
  }
  func.func @transform_6(%arg0: i32) -> (i32, i32) {
    %c0_i32 = arith.constant 0 : i32
    %c0_i32_0 = arith.constant 0 : i32
    %c0_i32_1 = arith.constant 0 : i32
    return %c0_i32, %c0_i32_0 : i32, i32
  }
  func.func @transform_7(%arg0: i32) -> (i32, i32) {
    %c0_i32 = arith.constant 0 : i32
    %c0_i32_0 = arith.constant 0 : i32
    return %c0_i32, %arg0 : i32, i32
  }
}

</mosaic_0001>

<llo_original>
// kernel: tpu_custom_call.1
$region0: #{tpu_custom_call.1}
  #allocation0 [shape = 'u32[]', space=smem, size = 0x4, offset = 0x4, fixed_abs, tag = 'smem constant byte address 0x4 - core index']
  #allocation1 [shape = 'u32[144,128]{1,0:T(1,128)}', space=vmem, size = 0x12000, scoped, tag = 'internal scratch']
  %s0 = inlined_call_operand.vmem [shape: f32[8,128], index: 0, kind: input, shape index: {}]
  %s1 = inlined_call_operand.vmem [shape: f32[32,8], index: 1, kind: input, shape index: {}]
  %s2 = inlined_call_operand.vmem [shape: f32[32,1], index: 2, kind: input, shape index: {}]
  %s3 = inlined_call_operand.vmem [shape: f32[32,32], index: 3, kind: input, shape index: {}]
  %s4 = inlined_call_operand.vmem [shape: f32[32,1], index: 4, kind: input, shape index: {}]
  %s5 = inlined_call_operand.vmem [shape: f32[16,32], index: 5, kind: input, shape index: {}]
  %s6 = inlined_call_operand.vmem [shape: f32[16,1], index: 6, kind: input, shape index: {}]
  %s7 = inlined_call_operand.hbm [shape: f32[16,128], index: 7, kind: output, shape index: {}]
  %s8 = sld [smem:[#allocation0]]
  $region38: #{tpu_custom_call.1} parent=0
    _
  %s10 = ssub.s32 1, %s8
  %s11 = scalar_select 0, %s10, %s8
  $region1: #{tpu_custom_call.1} parent=0
    #allocation2 [shape = 'u8[8192]{0}', space=vmem, size = 0x2000, scoped, tag = 'output window, operand 0, single buffered']
    #allocation3 [shape = 's32[1]{0}', space=sflag, size = 0x4, scoped, tag = 'scoped memory for tpu_custom_call.1']
    %12 = vsyncpa [#allocation3], 0
    // Predicated region
    $region2: #{tpu_custom_call.1} parent=1 // pred_check
      _
    $region3: #{tpu_custom_call.1} parent=1 // pred_check_branch
      %14 = sbr.rel (0) target = $region5
    $region4: #{tpu_custom_call.1} parent=1 // pred_region
      _
    $region5: #{tpu_custom_call.1} parent=1 // pred_fallthru
      _
    // Predicated region
    $region6: #{tpu_custom_call.1} parent=1 // pred_check
      _
    $region7: #{tpu_custom_call.1} parent=1 // pred_check_branch
      %16 = sbr.rel (0) target = $region9
    $region8: #{tpu_custom_call.1} parent=1 // pred_region
      _
    $region9: #{tpu_custom_call.1} parent=1 // pred_fallthru
      _
    // Predicated region
    $region10: #{tpu_custom_call.1} parent=1 // pred_check
      _
    $region11: #{tpu_custom_call.1} parent=1 // pred_check_branch
      %18 = sbr.rel (0) target = $region13
    $region12: #{tpu_custom_call.1} parent=1 // pred_region
      _
    $region13: #{tpu_custom_call.1} parent=1 // pred_fallthru
      _
    // Predicated region
    $region14: #{tpu_custom_call.1} parent=1 // pred_check
      _
    $region15: #{tpu_custom_call.1} parent=1 // pred_check_branch
      %20 = sbr.rel (0) target = $region17
    $region16: #{tpu_custom_call.1} parent=1 // pred_region
      _
    $region17: #{tpu_custom_call.1} parent=1 // pred_fallthru
      _
    // Predicated region
    $region18: #{tpu_custom_call.1} parent=1 // pred_check
      _
    $region19: #{tpu_custom_call.1} parent=1 // pred_check_branch
      %22 = sbr.rel (0) target = $region21
    $region20: #{tpu_custom_call.1} parent=1 // pred_region
      _
    $region21: #{tpu_custom_call.1} parent=1 // pred_fallthru
      _
    // Predicated region
    $region22: #{tpu_custom_call.1} parent=1 // pred_check
      _
    $region23: #{tpu_custom_call.1} parent=1 // pred_check_branch
      %24 = sbr.rel (0) target = $region25
    $region24: #{tpu_custom_call.1} parent=1 // pred_region
      _
    $region25: #{tpu_custom_call.1} parent=1 // pred_fallthru
      _
    // Predicated region
    $region26: #{tpu_custom_call.1} parent=1 // pred_check
      _
    $region27: #{tpu_custom_call.1} parent=1 // pred_check_branch
      %26 = sbr.rel (0) target = $region29
    $region28: #{tpu_custom_call.1} parent=1 // pred_region
      _
    $region29: #{tpu_custom_call.1} parent=1 // pred_fallthru
      _
    %v27 = vld [vmem:[%s1] sm:$0xff]
    %v28 = vld [vmem:[%s1 + $0x8] sm:$0xff]
    %v29 = vld [vmem:[%s1 + $0x10] sm:$0xff]
    %v30 = vld [vmem:[%s1 + $0x18] sm:$0xff]
    %v31 = vld [vmem:[%s3] sm:$0xff]
    %v32 = vld [vmem:[%s3 + $0x8] sm:$0xff]
    %v33 = vld [vmem:[%s3 + $0x10] sm:$0xff]
    %v34 = vld [vmem:[%s3 + $0x18] sm:$0xff]
    %v35 = vld [vmem:[%s5] sm:$0xff]
    %v36 = vld [vmem:[%s5 + $0x8] sm:$0xff]
    %v37 = vld [vmem:[%s2] sm:$0xff]
    %v38 = vld [vmem:[%s2 + $0x8] sm:$0xff]
    %v39 = vld [vmem:[%s2 + $0x10] sm:$0xff]
    %v40 = vld [vmem:[%s2 + $0x18] sm:$0xff]
    %v41 = vld [vmem:[%s4] sm:$0xff]
    %v42 = vld [vmem:[%s4 + $0x8] sm:$0xff]
    %v43 = vld [vmem:[%s4 + $0x10] sm:$0xff]
    %v44 = vld [vmem:[%s4 + $0x18] sm:$0xff]
    %v45 = vld [vmem:[%s6] sm:$0xff]
    %v46 = vld [vmem:[%s6 + $0x8] sm:$0xff]
    %v47 = vld [vmem:[%s0] sm:$0xff]
    %49 = vset.pattern.permute.xlu0 0
    %50 = vperm.xlu0 %49, %v37
    %v51 = vpop.permute.xlu0 %50
    %54 = vset.pattern.permute.xlu0 0
    %55 = vperm.xlu0 %54, %v38
    %v56 = vpop.permute.xlu0 %55
    %59 = vset.pattern.permute.xlu0 0
    %60 = vperm.xlu0 %59, %v39
    %v61 = vpop.permute.xlu0 %60
    %64 = vset.pattern.permute.xlu0 0
    %65 = vperm.xlu0 %64, %v40
    %v66 = vpop.permute.xlu0 %65
    %vm68 = vcmask 64512
    %v70 = vsel %vm68, %v27, 0
    %v73 = vsel %vm68, %v28, 0
    %v76 = vsel %vm68, %v29, 0
    %v79 = vsel %vm68, %v30, 0
    %81 = vmatprep.subr.mxu0 0.0
    %82 = vmatpush1.msra.mxu0 0.0
    %83 = vmatprep.subr.mxu0 0.0
    %84 = vmatpush1.msra.mxu0 0.0
    %85 = vmatprep.subr.mxu0 0.0
    %86 = vmatpush1.msra.mxu0 0.0
    %87 = vmatprep.subr.mxu0 0.0
    %88 = vmatpush1.msra.mxu0 0.0
    %89 = vmatprep.subr.mxu0 0.0
    %90 = vmatpush1.msra.mxu0 0.0
    %91 = vmatprep.subr.mxu0 0.0
    %92 = vmatpush1.msra.mxu0 0.0
    %93 = vmatprep.subr.mxu0 0.0
    %94 = vmatpush1.msra.mxu0 0.0
    %95 = vmatprep.subr.mxu0 0.0
    %96 = vmatpush1.msra.mxu0 0.0
    %97 = vmatprep.subr.mxu0 0.0
    %98 = vmatpush1.msra.mxu0 0.0
    %99 = vmatprep.subr.mxu0 0.0
    %100 = vmatpush1.msra.mxu0 0.0
    %101 = vmatprep.subr.mxu0 0.0
    %102 = vmatpush1.msra.mxu0 0.0
    %103 = vmatprep.subr.mxu0 0.0
    %104 = vmatpush1.msra.mxu0 0.0
    %105 = vmatprep.subr.mxu0 0.0
    %106 = vmatpush1.msra.mxu0 0.0
    %107 = vmatprep.subr.mxu0 0.0
    %108 = vmatpush1.msra.mxu0 0.0
    %109 = vmatprep.subr.mxu0 0.0
    %110 = vmatpush1.msra.mxu0 0.0
    %111 = vmatprep.subr.mxu0 0.0
    %112 = vmatpush1.msra.mxu0 %v47
    %113 = vmatprep.subr.mxu0 0.0
    %114 = vmatpush2.msra.mxu0 0.0
    %115 = vmatprep.subr.mxu0 0.0
    %116 = vmatpush2.msra.mxu0 0.0
    %117 = vmatprep.subr.mxu0 0.0
    %118 = vmatpush2.msra.mxu0 0.0
    %119 = vmatprep.subr.mxu0 0.0
    %120 = vmatpush2.msra.mxu0 0.0
    %121 = vmatprep.subr.mxu0 0.0
    %122 = vmatpush2.msra.mxu0 0.0
    %123 = vmatprep.subr.mxu0 0.0
    %124 = vmatpush2.msra.mxu0 0.0
    %125 = vmatprep.subr.mxu0 0.0
    %126 = vmatpush2.msra.mxu0 0.0
    %127 = vmatprep.subr.mxu0 0.0
    %128 = vmatpush2.msra.mxu0 0.0
    %129 = vmatprep.subr.mxu0 0.0
    %130 = vmatpush2.msra.mxu0 0.0
    %131 = vmatprep.subr.mxu0 0.0
    %132 = vmatpush2.msra.mxu0 0.0
    %133 = vmatprep.subr.mxu0 0.0
    %134 = vmatpush2.msra.mxu0 0.0
    %135 = vmatprep.subr.mxu0 0.0
    %136 = vmatpush2.msra.mxu0 0.0
    %137 = vmatprep.subr.mxu0 0.0
    %138 = vmatpush2.msra.mxu0 0.0
    %139 = vmatprep.subr.mxu0 0.0
    %140 = vmatpush2.msra.mxu0 0.0
    %141 = vmatprep.subr.mxu0 0.0
    %142 = vmatpush2.msra.mxu0 0.0
    %143 = vmatprep.subr.mxu0 0.0
    %144 = vmatpush2.msra.mxu0 0.0
    %145 = vmatprep.mubr.f32.mxu0 0.0
    %146 = vmatmul.mubr.f32.gmra.mxu0 %v70
    %v147 = vpop.f32.mrf.mxu0
    %v148 = vadd.f32 %v51, %v147
    %v149 = vpop.f32.mrf.mxu0
    %150 = vmatprep.mubr.f32.mxu0 0.0
    %151 = vmatmul.mubr.f32.gmra.mxu0 %v73
    %v152 = vpop.f32.mrf.mxu0
    %v153 = vadd.f32 %v56, %v152
    %v154 = vpop.f32.mrf.mxu0
    %155 = vmatprep.mubr.f32.mxu0 0.0
    %156 = vmatmul.mubr.f32.gmra.mxu0 %v76
    %v157 = vpop.f32.mrf.mxu0
    %v158 = vadd.f32 %v61, %v157
    %v159 = vpop.f32.mrf.mxu0
    %160 = vmatprep.mubr.f32.mxu0 0.0
    %161 = vmatmul.mubr.f32.gmra.mxu0 %v79
    %v162 = vpop.f32.mrf.mxu0
    %v163 = vadd.f32 %v66, %v162
    %v164 = vpop.f32.mrf.mxu0
    %165 = vdwg.mxu0
    %v166 = vtanh.pop %v148
    %v167 = vtanh.pop %v153
    %v168 = vtanh.pop %v158
    %v169 = vtanh.pop %v163
    %171 = vset.pattern.permute.xlu0 0
    %172 = vperm.xlu0 %171, %v41
    %v173 = vpop.permute.xlu0 %172
    %176 = vset.pattern.permute.xlu0 0
    %177 = vperm.xlu0 %176, %v42
    %v178 = vpop.permute.xlu0 %177
    %181 = vset.pattern.permute.xlu0 0
    %182 = vperm.xlu0 %181, %v43
    %v183 = vpop.permute.xlu0 %182
    %186 = vset.pattern.permute.xlu0 0
    %187 = vperm.xlu0 %186, %v44
    %v188 = vpop.permute.xlu0 %187
    %vm190 = vcmask 261120
    %v192 = vsel %vm190, %v31, 0
    %v195 = vsel %vm190, %v32, 0
    %v198 = vsel %vm190, %v33, 0
    %v201 = vsel %vm190, %v34, 0
    %203 = vmatprep.subr.mxu0 0.0
    %204 = vmatpush1.msra.mxu0 0.0
    %205 = vmatprep.subr.mxu0 0.0
    %206 = vmatpush1.msra.mxu0 0.0
    %207 = vmatprep.subr.mxu0 0.0
    %208 = vmatpush1.msra.mxu0 0.0
    %209 = vmatprep.subr.mxu0 0.0
    %210 = vmatpush1.msra.mxu0 0.0
    %211 = vmatprep.subr.mxu0 0.0
    %212 = vmatpush1.msra.mxu0 0.0
    %213 = vmatprep.subr.mxu0 0.0
    %214 = vmatpush1.msra.mxu0 0.0
    %215 = vmatprep.subr.mxu0 0.0
    %216 = vmatpush1.msra.mxu0 0.0
    %217 = vmatprep.subr.mxu0 0.0
    %218 = vmatpush1.msra.mxu0 0.0
    %219 = vmatprep.subr.mxu0 0.0
    %220 = vmatpush1.msra.mxu0 0.0
    %221 = vmatprep.subr.mxu0 0.0
    %222 = vmatpush1.msra.mxu0 0.0
    %223 = vmatprep.subr.mxu0 0.0
    %224 = vmatpush1.msra.mxu0 0.0
    %225 = vmatprep.subr.mxu0 0.0
    %226 = vmatpush1.msra.mxu0 0.0
    %227 = vmatprep.subr.mxu0 0.0
    %228 = vmatpush1.msra.mxu0 %v169
    %229 = vmatprep.subr.mxu0 0.0
    %230 = vmatpush1.msra.mxu0 %v168
    %231 = vmatprep.subr.mxu0 0.0
    %232 = vmatpush1.msra.mxu0 %v167
    %233 = vmatprep.subr.mxu0 0.0
    %234 = vmatpush1.msra.mxu0 %v166
    %235 = vmatprep.subr.mxu0 0.0
    %236 = vmatpush2.msra.mxu0 0.0
    %237 = vmatprep.subr.mxu0 0.0
    %238 = vmatpush2.msra.mxu0 0.0
    %239 = vmatprep.subr.mxu0 0.0
    %240 = vmatpush2.msra.mxu0 0.0
    %241 = vmatprep.subr.mxu0 0.0
    %242 = vmatpush2.msra.mxu0 0.0
    %243 = vmatprep.subr.mxu0 0.0
    %244 = vmatpush2.msra.mxu0 0.0
    %245 = vmatprep.subr.mxu0 0.0
    %246 = vmatpush2.msra.mxu0 0.0
    %247 = vmatprep.subr.mxu0 0.0
    %248 = vmatpush2.msra.mxu0 0.0
    %249 = vmatprep.subr.mxu0 0.0
    %250 = vmatpush2.msra.mxu0 0.0
    %251 = vmatprep.subr.mxu0 0.0
    %252 = vmatpush2.msra.mxu0 0.0
    %253 = vmatprep.subr.mxu0 0.0
    %254 = vmatpush2.msra.mxu0 0.0
    %255 = vmatprep.subr.mxu0 0.0
    %256 = vmatpush2.msra.mxu0 0.0
    %257 = vmatprep.subr.mxu0 0.0
    %258 = vmatpush2.msra.mxu0 0.0
    %259 = vmatprep.subr.mxu0 0.0
    %260 = vmatpush2.msra.mxu0 0.0
    %261 = vmatprep.subr.mxu0 0.0
    %262 = vmatpush2.msra.mxu0 0.0
    %263 = vmatprep.subr.mxu0 0.0
    %264 = vmatpush2.msra.mxu0 0.0
    %265 = vmatprep.subr.mxu0 0.0
    %266 = vmatpush2.msra.mxu0 0.0
    %267 = vmatprep.mubr.f32.mxu0 0.0
    %268 = vmatmul.mubr.f32.gmra.mxu0 %v192
    %v269 = vpop.f32.mrf.mxu0
    %v270 = vadd.f32 %v173, %v269
    %v271 = vpop.f32.mrf.mxu0
    %272 = vmatprep.mubr.f32.mxu0 0.0
    %273 = vmatmul.mubr.f32.gmra.mxu0 %v195
    %v274 = vpop.f32.mrf.mxu0
    %v275 = vadd.f32 %v178, %v274
    %v276 = vpop.f32.mrf.mxu0
    %277 = vmatprep.mubr.f32.mxu0 0.0
    %278 = vmatmul.mubr.f32.gmra.mxu0 %v198
    %v279 = vpop.f32.mrf.mxu0
    %v280 = vadd.f32 %v183, %v279
    %v281 = vpop.f32.mrf.mxu0
    %282 = vmatprep.mubr.f32.mxu0 0.0
    %283 = vmatmul.mubr.f32.gmra.mxu0 %v201
    %v284 = vpop.f32.mrf.mxu0
    %v285 = vadd.f32 %v188, %v284
    %v286 = vpop.f32.mrf.mxu0
    %287 = vdwg.mxu0
    %v288 = vtanh.pop %v270
    %v289 = vtanh.pop %v275
    %v290 = vtanh.pop %v280
    %v291 = vtanh.pop %v285
    %293 = vset.pattern.permute.xlu0 0
    %294 = vperm.xlu0 %293, %v45
    %v295 = vpop.permute.xlu0 %294
    %298 = vset.pattern.permute.xlu0 0
    %299 = vperm.xlu0 %298, %v46
    %v300 = vpop.permute.xlu0 %299
    %v303 = vsel %vm190, %v35, 0
    %v306 = vsel %vm190, %v36, 0
    %308 = vmatprep.subr.mxu0 0.0
    %309 = vmatpush1.msra.mxu0 0.0
    %310 = vmatprep.subr.mxu0 0.0
    %311 = vmatpush1.msra.mxu0 0.0
    %312 = vmatprep.subr.mxu0 0.0
    %313 = vmatpush1.msra.mxu0 0.0
    %314 = vmatprep.subr.mxu0 0.0
    %315 = vmatpush1.msra.mxu0 0.0
    %316 = vmatprep.subr.mxu0 0.0
    %317 = vmatpush1.msra.mxu0 0.0
    %318 = vmatprep.subr.mxu0 0.0
    %319 = vmatpush1.msra.mxu0 0.0
    %320 = vmatprep.subr.mxu0 0.0
    %321 = vmatpush1.msra.mxu0 0.0
    %322 = vmatprep.subr.mxu0 0.0
    %323 = vmatpush1.msra.mxu0 0.0
    %324 = vmatprep.subr.mxu0 0.0
    %325 = vmatpush1.msra.mxu0 0.0
    %326 = vmatprep.subr.mxu0 0.0
    %327 = vmatpush1.msra.mxu0 0.0
    %328 = vmatprep.subr.mxu0 0.0
    %329 = vmatpush1.msra.mxu0 0.0
    %330 = vmatprep.subr.mxu0 0.0
    %331 = vmatpush1.msra.mxu0 0.0
    %332 = vmatprep.subr.mxu0 0.0
    %333 = vmatpush1.msra.mxu0 %v291
    %334 = vmatprep.subr.mxu0 0.0
    %335 = vmatpush1.msra.mxu0 %v290
    %336 = vmatprep.subr.mxu0 0.0
    %337 = vmatpush1.msra.mxu0 %v289
    %338 = vmatprep.subr.mxu0 0.0
    %339 = vmatpush1.msra.mxu0 %v288
    %340 = vmatprep.subr.mxu0 0.0
    %341 = vmatpush2.msra.mxu0 0.0
    %342 = vmatprep.subr.mxu0 0.0
    %343 = vmatpush2.msra.mxu0 0.0
    %344 = vmatprep.subr.mxu0 0.0
    %345 = vmatpush2.msra.mxu0 0.0
    %346 = vmatprep.subr.mxu0 0.0
    %347 = vmatpush2.msra.mxu0 0.0
    %348 = vmatprep.subr.mxu0 0.0
    %349 = vmatpush2.msra.mxu0 0.0
    %350 = vmatprep.subr.mxu0 0.0
    %351 = vmatpush2.msra.mxu0 0.0
    %352 = vmatprep.subr.mxu0 0.0
    %353 = vmatpush2.msra.mxu0 0.0
    %354 = vmatprep.subr.mxu0 0.0
    %355 = vmatpush2.msra.mxu0 0.0
    %356 = vmatprep.subr.mxu0 0.0
    %357 = vmatpush2.msra.mxu0 0.0
    %358 = vmatprep.subr.mxu0 0.0
    %359 = vmatpush2.msra.mxu0 0.0
    %360 = vmatprep.subr.mxu0 0.0
    %361 = vmatpush2.msra.mxu0 0.0
    %362 = vmatprep.subr.mxu0 0.0
    %363 = vmatpush2.msra.mxu0 0.0
    %364 = vmatprep.subr.mxu0 0.0
    %365 = vmatpush2.msra.mxu0 0.0
    %366 = vmatprep.subr.mxu0 0.0
    %367 = vmatpush2.msra.mxu0 0.0
    %368 = vmatprep.subr.mxu0 0.0
    %369 = vmatpush2.msra.mxu0 0.0
    %370 = vmatprep.subr.mxu0 0.0
    %371 = vmatpush2.msra.mxu0 0.0
    %372 = vmatprep.mubr.f32.mxu0 0.0
    %373 = vmatmul.mubr.f32.gmra.mxu0 %v303
    %v374 = vpop.f32.mrf.mxu0
    %v375 = vadd.f32 %v295, %v374
    %v376 = vpop.f32.mrf.mxu0
    %377 = vmatprep.mubr.f32.mxu0 0.0
    %378 = vmatmul.mubr.f32.gmra.mxu0 %v306
    %v379 = vpop.f32.mrf.mxu0
    %v380 = vadd.f32 %v300, %v379
    %v381 = vpop.f32.mrf.mxu0
    %382 = vdwg.mxu0
    %383 = vst [vmem:[#allocation2] sm:$0xff] %v375
    %384 = vst [vmem:[#allocation2 + $0x8] sm:$0xff] %v380
    // Predicated region
    $region30: #{tpu_custom_call.1} parent=1 // pred_check
      _
    $region31: #{tpu_custom_call.1} parent=1 // pred_check_branch
      %386 = sbr.rel (0) target = $region33
    $region32: #{tpu_custom_call.1} parent=1 // pred_region
      %s388 = ssub.s32 256, 256
      %389 = vsyncadd [#allocation3], %s388
      %s390 = sshll.u32 [#allocation2], 4
      %s391 = int_to_ptr.vmem [resolvable:$true] %s390
      %396 = dma.vmem_to_hbm [thread:$0]  %s391, 256, %s7, [#allocation3], 128, 128, 8
    $region33: #{tpu_custom_call.1} parent=1 // pred_fallthru
      _
    // Predicated region
    $region34: #{tpu_custom_call.1} parent=1 // pred_check
      _
    $region35: #{tpu_custom_call.1} parent=1 // pred_check_branch
      %398 = sbr.rel (0) target = $region37
    $region36: #{tpu_custom_call.1} parent=1 // pred_region
      %399 = dma.done [#allocation3], 256
    $region37: #{tpu_custom_call.1} parent=1 // pred_fallthru
      _
    %400 = vsyncpa [#allocation3], 1

</llo_original>
